<compile_context>
chip_gen: v6e
topology: v6e:2x2x1
jax: 0.10.0
libtpu: 0.0.40
codegen_flags: <defaults>
</compile_context>

<pallas_src>
import functools
import math

import jax
import jax.numpy as jnp
from jax.experimental import pallas as pl
from jax.experimental.pallas import tpu as pltpu


def _npair_rowden_kernel(ei_ref, ej_ref, logden_ref, acc_ref, *,
                         inv_temperature, pad_cols):
    """Accumulate den_i = sum_{j != i} exp(s_ij) + 1 over column blocks.

    Grid = (row blocks, column blocks); the column axis is the reduction axis.
    Writes log(den_i) for the current row block on the last column step.
    """
    i = pl.program_id(0)
    j = pl.program_id(1)

    @pl.when(j == 0)
    def _init():
        acc_ref[...] = jnp.zeros_like(acc_ref)

    # Row-wise L2 normalization (F.normalize, p=2, eps=1e-12) in f32 via the
    # EUP rsqrt path; inputs may arrive as bf16/f32 and are upcast here.
    ei = ei_ref[...].astype(jnp.float32)                        # (t, D)
    ej = ej_ref[...].astype(jnp.float32)                        # (t, D)
    ei = ei * jax.lax.rsqrt(
        jnp.maximum(jnp.sum(ei * ei, axis=1, keepdims=True), jnp.float32(1e-24)))
    ej = ej * jax.lax.rsqrt(
        jnp.maximum(jnp.sum(ej * ej, axis=1, keepdims=True), jnp.float32(1e-24)))

    # Similarity tile on the MXU: bf16 operands, f32 accumulation, contracting
    # the feature axis of both operands directly (no materialized transpose).
    sim = jax.lax.dot_general(
        ei.astype(jnp.bfloat16), ej.astype(jnp.bfloat16),
        (((1,), (1,)), ((), ())),
        preferred_element_type=jnp.float32) * jnp.float32(inv_temperature)

    # NOTE: exp is deliberately un-stabilized (no log-sum-exp) to match the
    # PyTorch reference bit-for-bit in behaviour; very small temperatures
    # overflow there too.
    p = jnp.exp(sim)                                            # (t, t)
    acc_ref[...] += jnp.sum(p, axis=1, keepdims=True)

    # Remove the self-similarity term. Only the B/t diagonal tiles pay for the
    # iota/compare/select; off-diagonal tiles skip it entirely.
    @pl.when(i == j)
    def _drop_diag():
        r = jax.lax.broadcasted_iota(jnp.int32, p.shape, 0)
        c = jax.lax.broadcasted_iota(jnp.int32, p.shape, 1)
        acc_ref[...] -= jnp.sum(jnp.where(r == c, p, 0.0), axis=1, keepdims=True)

    @pl.when(j == pl.num_programs(1) - 1)
    def _finalize():
        # "+1": the masked diagonal entry contributes exp(0)=1 in the
        # reference denominator.  Zero-padded columns also contribute exactly
        # exp(0)=1 apiece, so their total is the compile-time constant
        # `pad_cols` and is subtracted here instead of per-tile masking.
        den = acc_ref[...] + jnp.float32(1.0 - pad_cols)
        logden_ref[...] = jnp.log(den)


def _round_up(x, m):
    return ((x + m - 1) // m) * m


def npair_loss(embeddings, labels=None, *, temperature=0.1):
    # `labels` only sets the batch size in the reference (eye(len(labels)));
    # its values never affect the loss, so it is not sent to the kernel.
    del labels
    B, D = embeddings.shape

    # Row/column tile: multiple of 8 sublanes, capped at 512 so the working
    # set (two operand blocks + one (t,t) f32 exp tile, double-buffered) stays
    # well inside v7x's 64 MiB VMEM as well as v5e/v6e.
    t = min(512, _round_up(B, 8))
    b_pad = _round_up(B, t)
    pad_rows = b_pad - B

    emb = embeddings  # keep the caller's dtype; upcast happens in-kernel
    if pad_rows:
        emb = jnp.pad(emb, ((0, pad_rows), (0, 0)))

    grid = (b_pad // t, b_pad // t)
    kernel = functools.partial(
        _npair_rowden_kernel,
        inv_temperature=1.0 / temperature,
        pad_cols=pad_rows)

    logden = pl.pallas_call(
        kernel,
        out_shape=jax.ShapeDtypeStruct((b_pad, 1), jnp.float32),
        grid_spec=pltpu.PrefetchScalarGridSpec(
            num_scalar_prefetch=0,
            grid=grid,
            in_specs=[
                pl.BlockSpec((t, D), lambda i, j: (i, 0)),   # query-row block
                pl.BlockSpec((t, D), lambda i, j: (j, 0)),   # key-row block
            ],
            out_specs=pl.BlockSpec((t, 1), lambda i, j: (i, 0)),
            scratch_shapes=[pltpu.VMEM((t, 1), jnp.float32)],
        ),
        compiler_params=pltpu.CompilerParams(
            dimension_semantics=("parallel", "arbitrary"),
            vmem_limit_bytes=64 * 1024 * 1024,
        ),
    )(emb, emb)

    # Numerator: s_ii == 1/temperature for L2-normalized rows, so
    # exp(sim*pos).sum(1) == exp(1/T) + (B-1) is a trace-time constant.
    # Computed as 1/T + log1p((B-1)exp(-1/T)) for small-T robustness.
    # TODO(synk): an all-zero embedding row has s_ii == 0, not 1/T; that
    # degenerate case deviates from this constant-numerator form.
    log_num = (1.0 / temperature) + math.log1p((B - 1) * math.exp(-1.0 / temperature))
    loss = jnp.mean(logden[:B, 0]) - jnp.float32(log_num)
    return loss


def _reference_loss(embeddings, temperature=0.1):
    # Pure-JAX mirror of the PyTorch forward (f32 matmul).
    e = embeddings / jnp.maximum(
        jnp.linalg.norm(embeddings, axis=1, keepdims=True), 1e-12)
    sim = jnp.matmul(e, e.T, precision=jax.lax.Precision.HIGHEST) / temperature
    B = e.shape[0]
    pos = jnp.eye(B, dtype=sim.dtype)
    neg = 1.0 - pos
    per_row = -jnp.log(jnp.sum(jnp.exp(sim * pos), axis=1)
                       / jnp.sum(jnp.exp(sim * neg), axis=1))
    return jnp.mean(per_row)


if __name__ == "__main__":
    # Small shapes consistent with the module: batch=8, embedding_dim=64.
    B, D = 8, 64
    key = jax.random.PRNGKey(0)
    k_emb, k_lab = jax.random.split(key)

    embeddings = jax.random.normal(k_emb, (B, D), dtype=jnp.float32)
    labels = jax.random.randint(k_lab, (B,), 0, 16, dtype=jnp.int32)

    loss = npair_loss(embeddings, labels, temperature=0.1)
    loss = jax.block_until_ready(loss)

    ref = _reference_loss(embeddings, temperature=0.1)
    assert jnp.isfinite(loss)
    assert jnp.allclose(loss, ref, rtol=5e-3, atol=5e-3), (loss, ref)

    print("KERNEL_OK")
</pallas_src>

<mosaic_0001>
module attributes {stable_mosaic.version = 11 : i64} {
  func.func @_npair_rowden_kernel(%arg0: i32, %arg1: i32, %arg2: memref<8x64xf32, #tpu.memory_space<vmem>>, %arg3: memref<8x64xf32, #tpu.memory_space<vmem>>, %arg4: memref<8x1xf32, #tpu.memory_space<vmem>>, %arg5: memref<8x1xf32, #tpu.memory_space<vmem>>) attributes {dimension_semantics = [#tpu.dimension_semantics<parallel>, #tpu.dimension_semantics<arbitrary>], iteration_bounds = array<i64: 1, 1>, scalar_prefetch = 0 : i64, scratch_operands = 1 : i64, tpu.core_type = #tpu.core_type<tc>, window_params = [{transform_indices = @transform_0, window_bounds = array<i64: 8, 64>}, {transform_indices = @transform_1, window_bounds = array<i64: 8, 64>}, {transform_indices = @transform_2, window_bounds = array<i64: 8, 1>}]} {
    %c0_i32 = arith.constant 0 : i32
    %0 = arith.cmpi eq, %arg1, %c0_i32 : i32
    %1 = arith.extui %0 : i1 to i32
    %c0_i32_0 = arith.constant 0 : i32
    %2 = arith.cmpi ne, %1, %c0_i32_0 : i32
    scf.if %2 {
      %cst_17 = arith.constant 0.000000e+00 : f32
      %38 = vector.broadcast %cst_17 : f32 to vector<8x1xf32>
      %c0_18 = arith.constant 0 : index
      %c0_19 = arith.constant 0 : index
      %39 = vector.load %arg5[%c0_18, %c0_19] : memref<8x1xf32, #tpu.memory_space<vmem>>, vector<8x1xf32>
      tpu.vector_store %arg5[%c0_18, %c0_19], %38 {strides = array<i32>} : memref<8x1xf32, #tpu.memory_space<vmem>>, vector<8x1xf32>,
    } else {
    }
    %c0 = arith.constant 0 : index
    %c0_1 = arith.constant 0 : index
    %3 = vector.load %arg2[%c0, %c0_1] : memref<8x64xf32, #tpu.memory_space<vmem>>, vector<8x64xf32>
    %c0_2 = arith.constant 0 : index
    %c0_3 = arith.constant 0 : index
    %4 = vector.load %arg3[%c0_2, %c0_3] : memref<8x64xf32, #tpu.memory_space<vmem>>, vector<8x64xf32>
    %5 = arith.mulf %3, %3 : vector<8x64xf32>
    %cst = arith.constant dense<0.000000e+00> : vector<8xf32>
    %6 = vector.multi_reduction <add>, %5, %cst [1] : vector<8x64xf32> to vector<8xf32>
    %7 = vector.shape_cast %6 : vector<8xf32> to vector<8x1xf32>
    %cst_4 = arith.constant 1.000000e-24 : f32
    %8 = vector.broadcast %cst_4 : f32 to vector<8x1xf32>
    %9 = arith.maximumf %7, %8 : vector<8x1xf32>
    %10 = math.rsqrt %9 : vector<8x1xf32>
    %11 = vector.broadcast %10 : vector<8x1xf32> to vector<8x64xf32>
    %12 = arith.mulf %3, %11 : vector<8x64xf32>
    %13 = arith.mulf %4, %4 : vector<8x64xf32>
    %cst_5 = arith.constant dense<0.000000e+00> : vector<8xf32>
    %14 = vector.multi_reduction <add>, %13, %cst_5 [1] : vector<8x64xf32> to vector<8xf32>
    %15 = vector.shape_cast %14 : vector<8xf32> to vector<8x1xf32>
    %cst_6 = arith.constant 1.000000e-24 : f32
    %16 = vector.broadcast %cst_6 : f32 to vector<8x1xf32>
    %17 = arith.maximumf %15, %16 : vector<8x1xf32>
    %18 = math.rsqrt %17 : vector<8x1xf32>
    %19 = vector.broadcast %18 : vector<8x1xf32> to vector<8x64xf32>
    %20 = arith.mulf %4, %19 : vector<8x64xf32>
    %21 = arith.truncf %12 : vector<8x64xf32> to vector<8x64xbf16>
    %22 = arith.truncf %20 : vector<8x64xf32> to vector<8x64xbf16>
    %cst_7 = arith.constant dense<0.000000e+00> : vector<8x8xf32>
    %23 = tpu.matmul %21, %22, %cst_7 {dimension_numbers = #tpu.dot_dimension_numbers<[1], [1], [0], [0], [0, 0, 1, 0], [], []>} : vector<8x64xbf16>, vector<8x64xbf16>, vector<8x8xf32> -> vector<8x8xf32>
    %cst_8 = arith.constant 1.000000e+01 : f32
    %24 = vector.broadcast %cst_8 : f32 to vector<8x8xf32>
    %25 = arith.mulf %23, %24 : vector<8x8xf32>
    %26 = math.exp %25 : vector<8x8xf32>
    %c0_9 = arith.constant 0 : index
    %c0_10 = arith.constant 0 : index
    %27 = vector.load %arg5[%c0_9, %c0_10] : memref<8x1xf32, #tpu.memory_space<vmem>>, vector<8x1xf32>
    %cst_11 = arith.constant dense<0.000000e+00> : vector<8xf32>
    %28 = vector.multi_reduction <add>, %26, %cst_11 [1] : vector<8x8xf32> to vector<8xf32>
    %29 = vector.shape_cast %28 : vector<8xf32> to vector<8x1xf32>
    %30 = arith.addf %27, %29 : vector<8x1xf32>
    %c0_12 = arith.constant 0 : index
    %c0_13 = arith.constant 0 : index
    %31 = vector.load %arg5[%c0_12, %c0_13] : memref<8x1xf32, #tpu.memory_space<vmem>>, vector<8x1xf32>
    tpu.vector_store %arg5[%c0_12, %c0_13], %30 {strides = array<i32>} : memref<8x1xf32, #tpu.memory_space<vmem>>, vector<8x1xf32>,
    %32 = arith.cmpi eq, %arg0, %arg1 : i32
    %33 = arith.extui %32 : i1 to i32
    %c0_i32_14 = arith.constant 0 : i32
    %34 = arith.cmpi ne, %33, %c0_i32_14 : i32
    scf.if %34 {
      %38 = tpu.iota {dimensions = array<i32: 0>} : vector<8x8xi32>
      %39 = tpu.iota {dimensions = array<i32: 1>} : vector<8x8xi32>
      %c0_17 = arith.constant 0 : index
      %c0_18 = arith.constant 0 : index
      %40 = vector.load %arg5[%c0_17, %c0_18] : memref<8x1xf32, #tpu.memory_space<vmem>>, vector<8x1xf32>
      %41 = arith.cmpi eq, %38, %39 : vector<8x8xi32>
      %cst_19 = arith.constant 0.000000e+00 : f32
      %42 = vector.broadcast %cst_19 : f32 to vector<8x8xf32>
      %43 = arith.select %41, %26, %42 : vector<8x8xi1>, vector<8x8xf32>
      %cst_20 = arith.constant dense<0.000000e+00> : vector<8xf32>
      %44 = vector.multi_reduction <add>, %43, %cst_20 [1] : vector<8x8xf32> to vector<8xf32>
      %45 = vector.shape_cast %44 : vector<8xf32> to vector<8x1xf32>
      %46 = arith.subf %40, %45 : vector<8x1xf32>
      %c0_21 = arith.constant 0 : index
      %c0_22 = arith.constant 0 : index
      %47 = vector.load %arg5[%c0_21, %c0_22] : memref<8x1xf32, #tpu.memory_space<vmem>>, vector<8x1xf32>
      tpu.vector_store %arg5[%c0_21, %c0_22], %46 {strides = array<i32>} : memref<8x1xf32, #tpu.memory_space<vmem>>, vector<8x1xf32>,
    } else {
    }
    %c0_i32_15 = arith.constant 0 : i32
    %35 = arith.cmpi eq, %arg1, %c0_i32_15 : i32
    %36 = arith.extui %35 : i1 to i32
    %c0_i32_16 = arith.constant 0 : i32
    %37 = arith.cmpi ne, %36, %c0_i32_16 : i32
    scf.if %37 {
      %c0_17 = arith.constant 0 : index
      %c0_18 = arith.constant 0 : index
      %38 = vector.load %arg5[%c0_17, %c0_18] : memref<8x1xf32, #tpu.memory_space<vmem>>, vector<8x1xf32>
      %cst_19 = arith.constant 1.000000e+00 : f32
      %39 = vector.broadcast %cst_19 : f32 to vector<8x1xf32>
      %40 = arith.addf %38, %39 : vector<8x1xf32>
      %41 = math.log %40 : vector<8x1xf32>
      %c0_20 = arith.constant 0 : index
      %c0_21 = arith.constant 0 : index
      %42 = vector.load %arg4[%c0_20, %c0_21] : memref<8x1xf32, #tpu.memory_space<vmem>>, vector<8x1xf32>
      tpu.vector_store %arg4[%c0_20, %c0_21], %41 {strides = array<i32>} : memref<8x1xf32, #tpu.memory_space<vmem>>, vector<8x1xf32>,
    } else {
    }
    return
  }
  func.func @transform_0(%arg0: i32, %arg1: i32) -> (i32, i32) {
    %c0_i32 = arith.constant 0 : i32
    %c0_i32_0 = arith.constant 0 : i32
    return %arg0, %c0_i32 : i32, i32
  }
  func.func @transform_1(%arg0: i32, %arg1: i32) -> (i32, i32) {
    %c0_i32 = arith.constant 0 : i32
    %c0_i32_0 = arith.constant 0 : i32
    return %arg1, %c0_i32 : i32, i32
  }
  func.func @transform_2(%arg0: i32, %arg1: i32) -> (i32, i32) {
    %c0_i32 = arith.constant 0 : i32
    %c0_i32_0 = arith.constant 0 : i32
    return %arg0, %c0_i32 : i32, i32
  }
}

</mosaic_0001>

<llo_original>
// kernel: tpu_custom_call.1
$region0: #{tpu_custom_call.1}
  #allocation0 [shape = 'u32[]', space=smem, size = 0x4, offset = 0x4, fixed_abs, tag = 'smem constant byte address 0x4 - core index']
  #allocation1 [shape = 'u32[144,128]{1,0:T(1,128)}', space=vmem, size = 0x12000, scoped, tag = 'internal scratch']
  #allocation2 [shape = 'f32[8,1]{1,0:T(8,128)}', space=vmem, size = 0x1000, scoped, tag = 'scratch operand']
  %s0 = inlined_call_operand.hbm [shape: f32[8,64], index: 0, kind: input, shape index: {}]
  %s1 = inlined_call_operand.hbm [shape: f32[8,64], index: 1, kind: input, shape index: {}]
  %s2 = inlined_call_operand.vmem [shape: f32[8,1], index: 2, kind: output, shape index: {}]
  %s3 = sld [smem:[#allocation0]]
  $region38: #{tpu_custom_call.1} parent=0
    _
  %s5 = ssub.s32 1, %s3
  %s6 = scalar_select 0, %s5, %s3
  $region1: #{tpu_custom_call.1} parent=0
    #allocation3 [shape = 'u8[4096]{0}', space=vmem, size = 0x1000, scoped, tag = 'input window, operand 0, single buffered']
    #allocation4 [shape = 's32[1]{0}', space=sflag, size = 0x4, scoped, tag = 'scoped memory for tpu_custom_call.1']
    #allocation5 [shape = 'u8[4096]{0}', space=vmem, size = 0x1000, scoped, tag = 'input window, operand 1, single buffered']
    #allocation6 [shape = 's32[1]{0}', space=sflag, size = 0x4, scoped, tag = 'scoped memory for tpu_custom_call.1']
    %7 = vsyncpa [#allocation4], 0
    %8 = vsyncpa [#allocation6], 0
    // Predicated region
    $region2: #{tpu_custom_call.1} parent=1 // pred_check
      _
    $region3: #{tpu_custom_call.1} parent=1 // pred_check_branch
      %10 = sbr.rel (0) target = $region5
    $region4: #{tpu_custom_call.1} parent=1 // pred_region
      %s12 = ssub.s32 128, 128
      %13 = vsyncadd [#allocation4], %s12
      %s15 = sshll.u32 [#allocation3], 4
      %s16 = int_to_ptr.vmem [resolvable:$true] %s15
      %18 = dma.hbm_to_vmem [thread:$0]  %s0, 128, %s16, [#allocation4]
    $region5: #{tpu_custom_call.1} parent=1 // pred_fallthru
      _
    // Predicated region
    $region6: #{tpu_custom_call.1} parent=1 // pred_check
      _
    $region7: #{tpu_custom_call.1} parent=1 // pred_check_branch
      %20 = sbr.rel (0) target = $region9
    $region8: #{tpu_custom_call.1} parent=1 // pred_region
      %s22 = ssub.s32 128, 128
      %23 = vsyncadd [#allocation6], %s22
      %s25 = sshll.u32 [#allocation5], 4
      %s26 = int_to_ptr.vmem [resolvable:$true] %s25
      %28 = dma.hbm_to_vmem [thread:$0]  %s1, 128, %s26, [#allocation6]
    $region9: #{tpu_custom_call.1} parent=1 // pred_fallthru
      _
    // Predicated region
    $region10: #{tpu_custom_call.1} parent=1 // pred_check
      _
    $region11: #{tpu_custom_call.1} parent=1 // pred_check_branch
      %30 = sbr.rel (0) target = $region13
    $region12: #{tpu_custom_call.1} parent=1 // pred_region
      %31 = dma.done [#allocation4], 128
    $region13: #{tpu_custom_call.1} parent=1 // pred_fallthru
      _
    // Predicated region
    $region14: #{tpu_custom_call.1} parent=1 // pred_check
      _
    $region15: #{tpu_custom_call.1} parent=1 // pred_check_branch
      %33 = sbr.rel (0) target = $region17
    $region16: #{tpu_custom_call.1} parent=1 // pred_region
      %34 = dma.done [#allocation6], 128
    $region17: #{tpu_custom_call.1} parent=1 // pred_fallthru
      _
    %p36 = scmp.eq.s32.totalorder 0, 0
    // Predicated region
    $region18: #{tpu_custom_call.1} parent=1 // pred_check
      %p37 = pneg %p36
    $region19: #{tpu_custom_call.1} parent=1 // pred_check_branch
      %39 = sbr.rel (%p37) target = $region21
    $region20: #{tpu_custom_call.1} parent=1 // pred_region
      %vm40 = vcmask 7168
      %41 = vst.msk [vmem:[#allocation2] sm:$0xff] %vm40, 0.0
    $region21: #{tpu_custom_call.1} parent=1 // pred_fallthru
      _
    %v42 = vld [vmem:[#allocation3] sm:$0xff]
    %v43 = vld [vmem:[#allocation5] sm:$0xff]
    %v44 = vmul.f32 %v42, %v42
    %vm45 = vcmask 523264
    %v46 = vsel %vm45, %v44, 0.0
    %47 = vadd.xlane.f32.xlu0 %v46
    %v48 = vpop.xlane.xlu0 %47
    %v49 = vmax.f32 %v48, 1e-24
    %v50 = vrsqrt.pop %v49
    %v51 = vmul.f32 %v42, %v50
    %v52 = vmul.f32 %v43, %v43
    %v53 = vsel %vm45, %v52, 0.0
    %54 = vadd.xlane.f32.xlu0 %v53
    %v55 = vpop.xlane.xlu0 %54
    %v56 = vmax.f32 %v55, 1e-24
    %v57 = vrsqrt.pop %v56
    %v58 = vmul.f32 %v43, %v57
    %v59 = vpack.c.bf16 %v51, %v51
    %v60 = vpack.c.bf16 %v58, %v58
    %v62 = vsel %vm45, %v59, 0
    %v65 = vsel %vm45, %v60, 0
    %67 = vmatprep.subr.bf16.mxu0 0
    %68 = vmatpush1.bf16.xpose.msra.mxu0 0
    %69 = vmatprep.subr.bf16.mxu0 0
    %70 = vmatpush1.bf16.xpose.msra.mxu0 0
    %71 = vmatprep.subr.bf16.mxu0 0
    %72 = vmatpush1.bf16.xpose.msra.mxu0 0
    %73 = vmatprep.subr.bf16.mxu0 0
    %74 = vmatpush1.bf16.xpose.msra.mxu0 0
    %75 = vmatprep.subr.bf16.mxu0 0
    %76 = vmatpush1.bf16.xpose.msra.mxu0 0
    %77 = vmatprep.subr.bf16.mxu0 0
    %78 = vmatpush1.bf16.xpose.msra.mxu0 0
    %79 = vmatprep.subr.bf16.mxu0 0
    %80 = vmatpush1.bf16.xpose.msra.mxu0 0
    %81 = vmatprep.subr.bf16.mxu0 0
    %82 = vmatpush1.bf16.xpose.msra.mxu0 %v65
    %83 = vmatprep.subr.bf16.mxu0 0
    %84 = vmatpush2.bf16.xpose.msra.mxu0 0
    %85 = vmatprep.subr.bf16.mxu0 0
    %86 = vmatpush2.bf16.xpose.msra.mxu0 0
    %87 = vmatprep.subr.bf16.mxu0 0
    %88 = vmatpush2.bf16.xpose.msra.mxu0 0
    %89 = vmatprep.subr.bf16.mxu0 0
    %90 = vmatpush2.bf16.xpose.msra.mxu0 0
    %91 = vmatprep.subr.bf16.mxu0 0
    %92 = vmatpush2.bf16.xpose.msra.mxu0 0
    %93 = vmatprep.subr.bf16.mxu0 0
    %94 = vmatpush2.bf16.xpose.msra.mxu0 0
    %95 = vmatprep.subr.bf16.mxu0 0
    %96 = vmatpush2.bf16.xpose.msra.mxu0 0
    %97 = vmatprep.subr.bf16.mxu0 0
    %98 = vmatpush2.bf16.xpose.msra.mxu0 0
    %99 = vmatprep.mubr.bf16.mxu0 0
    %100 = vmatmul.mubr.bf16.gmra.mxu0 %v62
    %v101 = vpop.f32.mrf.mxu0
    %v102 = vadd.f32 0.0, %v101
    %v103 = vpop.f32.mrf.mxu0
    %v104 = vpop.f32.mrf.mxu0
    %v105 = vpop.f32.mrf.mxu0
    %106 = vdwg.mxu0
    %v107 = vmul.f32 %v102, 10.0
    %v108 = vmul.f32 %v107, 1.442695
    %v109 = vpow.pop %v108
    %v110 = vld [vmem:[#allocation2] sm:$0xff]
    %vm111 = vcmask 64512
    %v112 = vsel %vm111, %v109, 0.0
    %113 = vadd.xlane.f32.xlu0 %v112
    %v114 = vpop.xlane.xlu0 %113
    %v115 = vadd.f32 %v110, %v114
    %vm116 = vcmask 7168
    %117 = vst.msk [vmem:[#allocation2] sm:$0xff] %vm116, %v115
    %p118 = scmp.eq.s32.totalorder 0, 0
    // Predicated region
    $region22: #{tpu_custom_call.1} parent=1 // pred_check
      %p119 = pneg %p118
    $region23: #{tpu_custom_call.1} parent=1 // pred_check_branch
      %121 = sbr.rel (%p119) target = $region25
    $region24: #{tpu_custom_call.1} parent=1 // pred_region
      %v122 = vlaneseq
      %v123 = vshrl.u32 %v122, 7
      %v124 = vlaneseq
      %v125 = vand.u32 %v124, 127
      %v126 = vld [vmem:[#allocation2] sm:$0xff]
      %vm127 = vcmp.eq.s32.totalorder %v123, %v125
      %v128 = vsel %vm127, %v109, 0.0
      %v129 = vsel %vm111, %v128, 0.0
      %130 = vadd.xlane.f32.xlu0 %v129
      %v131 = vpop.xlane.xlu0 %130
      %v132 = vsub.f32 %v126, %v131
      %133 = vst.msk [vmem:[#allocation2] sm:$0xff] %vm116, %v132
    $region25: #{tpu_custom_call.1} parent=1 // pred_fallthru
      _
    // Predicated region
    $region26: #{tpu_custom_call.1} parent=1 // pred_check
      %p134 = pneg %p36
    $region27: #{tpu_custom_call.1} parent=1 // pred_check_branch
      %136 = sbr.rel (%p134) target = $region29
    $region28: #{tpu_custom_call.1} parent=1 // pred_region
      %v137 = vld [vmem:[#allocation2] sm:$0xff]
      %v138 = vadd.f32 %v137, 1.0
      %v139 = vlog2.pop %v138
      %v140 = vmul.f32 %v139, 0.6931472
      %141 = vst.msk [vmem:[%s2] sm:$0xff] %vm116, %v140
    $region29: #{tpu_custom_call.1} parent=1 // pred_fallthru
      _
    // Predicated region
    $region30: #{tpu_custom_call.1} parent=1 // pred_check
      _
    $region31: #{tpu_custom_call.1} parent=1 // pred_check_branch
      %143 = sbr.rel (0) target = $region33
    $region32: #{tpu_custom_call.1} parent=1 // pred_region
      _
    $region33: #{tpu_custom_call.1} parent=1 // pred_fallthru
      _
    // Predicated region
    $region34: #{tpu_custom_call.1} parent=1 // pred_check
      _
    $region35: #{tpu_custom_call.1} parent=1 // pred_check_branch
      %145 = sbr.rel (0) target = $region37
    $region36: #{tpu_custom_call.1} parent=1 // pred_region
      _
    $region37: #{tpu_custom_call.1} parent=1 // pred_fallthru
      _
    %146 = vsyncpa [#allocation4], 1
    %147 = vsyncpa [#allocation6], 1

</llo_original>
